<compile_context>
chip_gen: v7x
topology: tpu7x:2x2x1
jax: 0.10.0
libtpu: 0.0.40
codegen_flags: <defaults>
</compile_context>

<pallas_src>
import math
from functools import partial

import jax
import jax.numpy as jnp
from jax import lax
from jax.experimental import pallas as pl
from jax.experimental.pallas import tpu as pltpu

_SQRT1_2 = 1.0 / math.sqrt(2.0)


def _round_up(x, m):
    return ((x + m - 1) // m) * m


# --------------------------------------------------------------------------- #
# Kernel
# --------------------------------------------------------------------------- #
def _projector_kernel(U, x_ref, w_ref, b_ref, o_ref):
    # x_ref: (D, bn)              batch on lanes, features on sublanes
    # w_ref: (D, 1 + 3U + U^2)    packed: [w_crop | W12*s | B12*s | W3*s | W4]
    # b_ref: (U + 2,)  SMEM       packed: [b_crop | b3*s | b4]   (s = 1/sqrt(2))
    x = x_ref[...]
    w = w_ref[...]

    def wcol(k):
        # (D, 1) column, lane-broadcast at the use site.
        return w[:, k:k + 1]

    c_crop = 0
    c_w12 = 1
    c_b12 = 1 + U
    c_w3 = 1 + 2 * U
    c_w4 = 1 + 2 * U + U * U

    b_crop = b_ref[0]
    b3 = [b_ref[1 + v] for v in range(U)]
    b4 = b_ref[1 + U]

    def gelu_from_scaled(acc):
        # acc = z / sqrt(2) (the 1/sqrt(2) is pre-folded into the weights), so
        # GELU(z) = 0.5*z*(1 + erf(z/sqrt(2))) = (acc*sqrt(1/2)) * (1 + erf(acc)).
        return (acc * _SQRT1_2) * (1.0 + lax.erf(acc))

    # ----- skip block 1 (layer 1 fused into its pre-GELU linear) -------------
    crop1 = x * wcol(c_crop) + b_crop                     # = layer-1 unit 1
    h1 = []
    for v in range(U):
        acc = x * wcol(c_w12 + v) + wcol(c_b12 + v)       # scaled pre-activation
        h1.append(crop1 + gelu_from_scaled(acc))          # build each output
                                                          # immediately (small
                                                          # live set)

    # ----- skip block 2 -------------------------------------------------------
    crop2 = h1[1]                                         # _Skip crop=(1,1), U==3
    h2 = []
    for v in range(U):
        acc = h1[0] * wcol(c_w3 + 0 * U + v)
        for u in range(1, U):
            acc = acc + h1[u] * wcol(c_w3 + u * U + v)
        acc = acc + b3[v]
        h2.append(crop2 + gelu_from_scaled(acc))

    # ----- layer 4: PointwiseLinear(D, U, 1) ---------------------------------
    out = h2[0] * wcol(c_w4 + 0)
    for u in range(1, U):
        out = out + h2[u] * wcol(c_w4 + u)
    out = out + b4                                        # (D, bn)

    # ----- _Norm(): per-column L2 norm over the feature (sublane) axis -------
    ssum = jnp.sum(out * out, axis=0, keepdims=True)      # XLU sublane reduce
    o_ref[...] = (out * lax.rsqrt(ssum)).astype(o_ref.dtype)   # EUP rsqrt


# --------------------------------------------------------------------------- #
# Wrapper-side packing, tiling, pallas_call
# --------------------------------------------------------------------------- #
def _pack_params(params):
    """Pack torch-shaped weights into one (D, NW) slab + one SMEM bias vector.

    Layer 1 is algebraically fused into the first skip block's pre-GELU linear
    and 1/sqrt(2) is folded into every pre-GELU weight/bias.
    """
    W1, b1, W2, b2, W3, b3, W4, b4 = params
    D, _, U = W1.shape
    assert U == 3, "_Skip crop=(1,1) only broadcasts for num_units == 3"

    w1 = W1[:, 0, :]                                                  # (D, U)
    # fused: acc1[d,v] = x[d]*W12s[d,v] + B12s[d,v]  (already times 1/sqrt(2))
    W12s = jnp.einsum('du,duv->dv', w1, W2) * _SQRT1_2                # (D, U)
    B12s = (jnp.einsum('u,duv->dv', b1.reshape(U), W2)
            + b2.reshape(1, U)) * _SQRT1_2                            # (D, U)
    W3s = W3.reshape(D, U * U) * _SQRT1_2                             # (D, U*U)

    wcat = jnp.concatenate(
        [w1[:, 1:2],            # crop-path weight (layer-1 unit 1)
         W12s, B12s, W3s,
         W4[:, :, 0]],          # (D, U)
        axis=1).astype(jnp.float32)                                   # (D, 1+3U+U^2)

    bcat = jnp.concatenate(
        [b1.reshape(U)[1:2],                    # crop-path bias
         b3.reshape(U) * _SQRT1_2,              # scaled skip-2 bias
         b4.reshape(1)]).astype(jnp.float32)    # (U + 2,)
    return wcat, bcat, U


def _choose_block_n(n_cols, block_n):
    # ~n/8 so the "parallel" grid axis has >= 8 steps (keeps both v7x TCs busy)
    bn = _round_up(pl.cdiv(n_cols, 8), 128)
    # ... but at least 1024 columns/step so the ~0.35us fixed per-step pipeline
    # overhead stays small vs the VALU-bound compute (single-TC v5e/v6e).
    bn = max(bn, 1024)
    # caller / VMEM cap (kept a multiple of 128 lanes)
    bn = min(bn, _round_up(max(block_n, 128), 128))
    # never let a block start out of bounds: only the standard ragged-last-block
    # case remains (per-column math => masked OOB lanes are harmless).
    bn = min(bn, (n_cols // 128) * 128)
    return max(bn, 128)


def pointwise_projector_t(xt, params, *, block_n=16384):
    """Fast path: input/output in (D, N) layout (batch on the lane axis)."""
    wcat, bcat, U = _pack_params(params)
    D, N = xt.shape
    NW = wcat.shape[1]
    NB = bcat.shape[0]

    # Tiny batches: pad up to one full 128-lane tile (sliced off below).
    Np = N
    if N < 128:
        xt = jnp.pad(xt, ((0, 0), (0, 128 - N)))
        Np = 128

    bn = _choose_block_n(Np, block_n)
    grid = (pl.cdiv(Np, bn),)

    cost = pl.CostEstimate(
        flops=60 * Np * D,                      # ~VALU ops per element
        transcendentals=2 * Np * D + Np,        # 2 erf / element + 1 rsqrt / column
        bytes_accessed=2 * Np * D * 4,          # stream x in, out back
    )

    out_t = pl.pallas_call(
        partial(_projector_kernel, U),
        out_shape=jax.ShapeDtypeStruct((D, Np), xt.dtype),
        grid=grid,
        in_specs=[
            pl.BlockSpec((D, bn), lambda i: (0, i)),            # x^T tile (streamed)
            pl.BlockSpec((D, NW), lambda i: (0, 0)),            # packed weights (resident)
            pl.BlockSpec((NB,), lambda i: (0,),
                         memory_space=pltpu.MemorySpace.SMEM),  # packed scalar biases
        ],
        out_specs=pl.BlockSpec((D, bn), lambda i: (0, i)),
        compiler_params=pltpu.CompilerParams(
            dimension_semantics=("parallel",)),
        cost_estimate=cost,
    )(xt, wcat, bcat)

    return out_t[:, :N] if Np != N else out_t


def pointwise_projector(x, params, *, block_n=16384):
    """Module-equivalent entry point: (N, D) -> (N, D)."""
    # TODO(synk): these two transposes are extra HBM passes; callers that can
    # hold activations in (D, N) layout should use pointwise_projector_t.
    xt = jnp.transpose(x)
    out_t = pointwise_projector_t(xt, params, block_n=block_n)
    return jnp.transpose(out_t)


# ---------------- deterministic init (matches torch __init__ shapes) ----------
def init_params(key, num_inputs, num_units):
    D, U = num_inputs, num_units

    def uniform(k, bound, shape):
        return jax.random.uniform(k, shape, jnp.float32, -bound, bound)

    ks = jax.random.split(key, 8)
    s = U ** 0.5
    W1 = uniform(ks[0], 1.0, (D, 1, U))      # PointwiseLinear(D, 1, U): bound=1**0.5
    b1 = uniform(ks[1], 1.0, (1, 1, U))
    W2 = uniform(ks[2], s, (D, U, U))        # PointwiseLinear(D, U, U): bound=U**0.5
    b2 = uniform(ks[3], s, (1, 1, U))
    W3 = uniform(ks[4], s, (D, U, U))
    b3 = uniform(ks[5], s, (1, 1, U))
    W4 = uniform(ks[6], s, (D, U, 1))        # PointwiseLinear(D, U, 1)
    b4 = uniform(ks[7], s, (1, 1, 1))
    return (W1, b1, W2, b2, W3, b3, W4, b4)


# ---------------- plain-JAX reference (mirrors the torch forward) -------------
def reference(x, params):
    W1, b1, W2, b2, W3, b3, W4, b4 = params
    h = jnp.einsum('ndi,dij->ndj', x[:, :, None], W1) + b1

    def skip(h, W, b):
        s = jax.nn.gelu(jnp.einsum('ndi,dij->ndj', h, W) + b, approximate=False)
        return h[..., 1:-1] + s

    h = skip(h, W2, b2)
    h = skip(h, W3, b3)
    out = (jnp.einsum('ndi,dij->ndj', h, W4) + b4)[..., 0]
    return out / jnp.linalg.norm(out, axis=1, keepdims=True)


if __name__ == "__main__":
    key = jax.random.PRNGKey(0)
    kx, kp, kx2 = jax.random.split(key, 3)

    N, num_inputs, num_units = 16, 8, 3
    x = jax.random.normal(kx, (N, num_inputs), jnp.float32)
    params = init_params(kp, num_inputs, num_units)

    y = jax.block_until_ready(pointwise_projector(x, params))
    y_ref = reference(x, params)
    assert y.shape == (N, num_inputs), y.shape
    err = float(jnp.max(jnp.abs(y - y_ref)))
    assert jnp.allclose(y, y_ref, rtol=1e-4, atol=1e-5), f"max abs err {err}"

    # Exercise the multi-step grid + ragged (masked) last block path:
    # N not a multiple of the tile width, no explicit padding.
    N2 = 200
    x2 = jax.random.normal(kx2, (N2, num_inputs), jnp.float32)
    y2 = jax.block_until_ready(pointwise_projector(x2, params, block_n=128))
    y2_ref = reference(x2, params)
    err2 = float(jnp.max(jnp.abs(y2 - y2_ref)))
    assert jnp.allclose(y2, y2_ref, rtol=1e-4, atol=1e-5), f"max abs err {err2}"

    print("KERNEL_OK")
</pallas_src>

<mosaic_0001>
module attributes {stable_mosaic.version = 11 : i64} {
  func.func @_projector_kernel(%arg0: i32, %arg1: memref<8x128xf32, #tpu.memory_space<vmem>>, %arg2: memref<8x19xf32, #tpu.memory_space<vmem>>, %arg3: memref<5xf32, #tpu.memory_space<smem>>, %arg4: memref<8x128xf32, #tpu.memory_space<vmem>>) attributes {dimension_semantics = [#tpu.dimension_semantics<parallel>], iteration_bounds = array<i64: 1>, scalar_prefetch = 0 : i64, scratch_operands = 0 : i64, tpu.core_type = #tpu.core_type<tc>, window_params = [{transform_indices = @transform_0, window_bounds = array<i64: 8, 128>}, {pipeline_mode = #tpu.pipeline_mode<synchronous>, transform_indices = @transform_1, window_bounds = array<i64: 8, 19>}, {transform_indices = @transform_2, window_bounds = array<i64: 5>}, {transform_indices = @transform_3, window_bounds = array<i64: 8, 128>}]} {
    %c0 = arith.constant 0 : index
    %c0_0 = arith.constant 0 : index
    %0 = vector.load %arg1[%c0, %c0_0] : memref<8x128xf32, #tpu.memory_space<vmem>>, vector<8x128xf32>
    %c0_1 = arith.constant 0 : index
    %c0_2 = arith.constant 0 : index
    %1 = vector.load %arg2[%c0_1, %c0_2] : memref<8x19xf32, #tpu.memory_space<vmem>>, vector<8x19xf32>
    %c0_3 = arith.constant 0 : index
    %2 = memref.load %arg3[%c0_3] : memref<5xf32, #tpu.memory_space<smem>>
    %c1 = arith.constant 1 : index
    %3 = memref.load %arg3[%c1] : memref<5xf32, #tpu.memory_space<smem>>
    %c2 = arith.constant 2 : index
    %4 = memref.load %arg3[%c2] : memref<5xf32, #tpu.memory_space<smem>>
    %c3 = arith.constant 3 : index
    %5 = memref.load %arg3[%c3] : memref<5xf32, #tpu.memory_space<smem>>
    %c4 = arith.constant 4 : index
    %6 = memref.load %arg3[%c4] : memref<5xf32, #tpu.memory_space<smem>>
    %7 = vector.extract_strided_slice %1 {offsets = [0, 0], sizes = [8, 1], strides = [1, 1]} : vector<8x19xf32> to vector<8x1xf32>
    %8 = vector.broadcast %7 : vector<8x1xf32> to vector<8x128xf32>
    %9 = arith.mulf %0, %8 : vector<8x128xf32>
    %10 = vector.broadcast %2 : f32 to vector<8x128xf32>
    %11 = arith.addf %9, %10 : vector<8x128xf32>
    %12 = vector.extract_strided_slice %1 {offsets = [0, 1], sizes = [8, 1], strides = [1, 1]} : vector<8x19xf32> to vector<8x1xf32>
    %13 = vector.broadcast %12 : vector<8x1xf32> to vector<8x128xf32>
    %14 = arith.mulf %0, %13 : vector<8x128xf32>
    %15 = vector.extract_strided_slice %1 {offsets = [0, 4], sizes = [8, 1], strides = [1, 1]} : vector<8x19xf32> to vector<8x1xf32>
    %16 = vector.broadcast %15 : vector<8x1xf32> to vector<8x128xf32>
    %17 = arith.addf %14, %16 : vector<8x128xf32>
    %cst = arith.constant 0.707106769 : f32
    %18 = vector.broadcast %cst : f32 to vector<8x128xf32>
    %19 = arith.mulf %17, %18 : vector<8x128xf32>
    %20 = math.erf %17 : vector<8x128xf32>
    %cst_4 = arith.constant 1.000000e+00 : f32
    %21 = vector.broadcast %cst_4 : f32 to vector<8x128xf32>
    %22 = arith.addf %21, %20 : vector<8x128xf32>
    %23 = arith.mulf %19, %22 : vector<8x128xf32>
    %24 = arith.addf %11, %23 : vector<8x128xf32>
    %25 = vector.extract_strided_slice %1 {offsets = [0, 2], sizes = [8, 1], strides = [1, 1]} : vector<8x19xf32> to vector<8x1xf32>
    %26 = vector.broadcast %25 : vector<8x1xf32> to vector<8x128xf32>
    %27 = arith.mulf %0, %26 : vector<8x128xf32>
    %28 = vector.extract_strided_slice %1 {offsets = [0, 5], sizes = [8, 1], strides = [1, 1]} : vector<8x19xf32> to vector<8x1xf32>
    %29 = vector.broadcast %28 : vector<8x1xf32> to vector<8x128xf32>
    %30 = arith.addf %27, %29 : vector<8x128xf32>
    %cst_5 = arith.constant 0.707106769 : f32
    %31 = vector.broadcast %cst_5 : f32 to vector<8x128xf32>
    %32 = arith.mulf %30, %31 : vector<8x128xf32>
    %33 = math.erf %30 : vector<8x128xf32>
    %cst_6 = arith.constant 1.000000e+00 : f32
    %34 = vector.broadcast %cst_6 : f32 to vector<8x128xf32>
    %35 = arith.addf %34, %33 : vector<8x128xf32>
    %36 = arith.mulf %32, %35 : vector<8x128xf32>
    %37 = arith.addf %11, %36 : vector<8x128xf32>
    %38 = vector.extract_strided_slice %1 {offsets = [0, 3], sizes = [8, 1], strides = [1, 1]} : vector<8x19xf32> to vector<8x1xf32>
    %39 = vector.broadcast %38 : vector<8x1xf32> to vector<8x128xf32>
    %40 = arith.mulf %0, %39 : vector<8x128xf32>
    %41 = vector.extract_strided_slice %1 {offsets = [0, 6], sizes = [8, 1], strides = [1, 1]} : vector<8x19xf32> to vector<8x1xf32>
    %42 = vector.broadcast %41 : vector<8x1xf32> to vector<8x128xf32>
    %43 = arith.addf %40, %42 : vector<8x128xf32>
    %cst_7 = arith.constant 0.707106769 : f32
    %44 = vector.broadcast %cst_7 : f32 to vector<8x128xf32>
    %45 = arith.mulf %43, %44 : vector<8x128xf32>
    %46 = math.erf %43 : vector<8x128xf32>
    %cst_8 = arith.constant 1.000000e+00 : f32
    %47 = vector.broadcast %cst_8 : f32 to vector<8x128xf32>
    %48 = arith.addf %47, %46 : vector<8x128xf32>
    %49 = arith.mulf %45, %48 : vector<8x128xf32>
    %50 = arith.addf %11, %49 : vector<8x128xf32>
    %51 = vector.extract_strided_slice %1 {offsets = [0, 7], sizes = [8, 1], strides = [1, 1]} : vector<8x19xf32> to vector<8x1xf32>
    %52 = vector.broadcast %51 : vector<8x1xf32> to vector<8x128xf32>
    %53 = arith.mulf %24, %52 : vector<8x128xf32>
    %54 = vector.extract_strided_slice %1 {offsets = [0, 10], sizes = [8, 1], strides = [1, 1]} : vector<8x19xf32> to vector<8x1xf32>
    %55 = vector.broadcast %54 : vector<8x1xf32> to vector<8x128xf32>
    %56 = arith.mulf %37, %55 : vector<8x128xf32>
    %57 = arith.addf %53, %56 : vector<8x128xf32>
    %58 = vector.extract_strided_slice %1 {offsets = [0, 13], sizes = [8, 1], strides = [1, 1]} : vector<8x19xf32> to vector<8x1xf32>
    %59 = vector.broadcast %58 : vector<8x1xf32> to vector<8x128xf32>
    %60 = arith.mulf %50, %59 : vector<8x128xf32>
    %61 = arith.addf %57, %60 : vector<8x128xf32>
    %62 = vector.broadcast %3 : f32 to vector<8x128xf32>
    %63 = arith.addf %61, %62 : vector<8x128xf32>
    %cst_9 = arith.constant 0.707106769 : f32
    %64 = vector.broadcast %cst_9 : f32 to vector<8x128xf32>
    %65 = arith.mulf %63, %64 : vector<8x128xf32>
    %66 = math.erf %63 : vector<8x128xf32>
    %cst_10 = arith.constant 1.000000e+00 : f32
    %67 = vector.broadcast %cst_10 : f32 to vector<8x128xf32>
    %68 = arith.addf %67, %66 : vector<8x128xf32>
    %69 = arith.mulf %65, %68 : vector<8x128xf32>
    %70 = arith.addf %37, %69 : vector<8x128xf32>
    %71 = vector.extract_strided_slice %1 {offsets = [0, 8], sizes = [8, 1], strides = [1, 1]} : vector<8x19xf32> to vector<8x1xf32>
    %72 = vector.broadcast %71 : vector<8x1xf32> to vector<8x128xf32>
    %73 = arith.mulf %24, %72 : vector<8x128xf32>
    %74 = vector.extract_strided_slice %1 {offsets = [0, 11], sizes = [8, 1], strides = [1, 1]} : vector<8x19xf32> to vector<8x1xf32>
    %75 = vector.broadcast %74 : vector<8x1xf32> to vector<8x128xf32>
    %76 = arith.mulf %37, %75 : vector<8x128xf32>
    %77 = arith.addf %73, %76 : vector<8x128xf32>
    %78 = vector.extract_strided_slice %1 {offsets = [0, 14], sizes = [8, 1], strides = [1, 1]} : vector<8x19xf32> to vector<8x1xf32>
    %79 = vector.broadcast %78 : vector<8x1xf32> to vector<8x128xf32>
    %80 = arith.mulf %50, %79 : vector<8x128xf32>
    %81 = arith.addf %77, %80 : vector<8x128xf32>
    %82 = vector.broadcast %4 : f32 to vector<8x128xf32>
    %83 = arith.addf %81, %82 : vector<8x128xf32>
    %cst_11 = arith.constant 0.707106769 : f32
    %84 = vector.broadcast %cst_11 : f32 to vector<8x128xf32>
    %85 = arith.mulf %83, %84 : vector<8x128xf32>
    %86 = math.erf %83 : vector<8x128xf32>
    %cst_12 = arith.constant 1.000000e+00 : f32
    %87 = vector.broadcast %cst_12 : f32 to vector<8x128xf32>
    %88 = arith.addf %87, %86 : vector<8x128xf32>
    %89 = arith.mulf %85, %88 : vector<8x128xf32>
    %90 = arith.addf %37, %89 : vector<8x128xf32>
    %91 = vector.extract_strided_slice %1 {offsets = [0, 9], sizes = [8, 1], strides = [1, 1]} : vector<8x19xf32> to vector<8x1xf32>
    %92 = vector.broadcast %91 : vector<8x1xf32> to vector<8x128xf32>
    %93 = arith.mulf %24, %92 : vector<8x128xf32>
    %94 = vector.extract_strided_slice %1 {offsets = [0, 12], sizes = [8, 1], strides = [1, 1]} : vector<8x19xf32> to vector<8x1xf32>
    %95 = vector.broadcast %94 : vector<8x1xf32> to vector<8x128xf32>
    %96 = arith.mulf %37, %95 : vector<8x128xf32>
    %97 = arith.addf %93, %96 : vector<8x128xf32>
    %98 = vector.extract_strided_slice %1 {offsets = [0, 15], sizes = [8, 1], strides = [1, 1]} : vector<8x19xf32> to vector<8x1xf32>
    %99 = vector.broadcast %98 : vector<8x1xf32> to vector<8x128xf32>
    %100 = arith.mulf %50, %99 : vector<8x128xf32>
    %101 = arith.addf %97, %100 : vector<8x128xf32>
    %102 = vector.broadcast %5 : f32 to vector<8x128xf32>
    %103 = arith.addf %101, %102 : vector<8x128xf32>
    %cst_13 = arith.constant 0.707106769 : f32
    %104 = vector.broadcast %cst_13 : f32 to vector<8x128xf32>
    %105 = arith.mulf %103, %104 : vector<8x128xf32>
    %106 = math.erf %103 : vector<8x128xf32>
    %cst_14 = arith.constant 1.000000e+00 : f32
    %107 = vector.broadcast %cst_14 : f32 to vector<8x128xf32>
    %108 = arith.addf %107, %106 : vector<8x128xf32>
    %109 = arith.mulf %105, %108 : vector<8x128xf32>
    %110 = arith.addf %37, %109 : vector<8x128xf32>
    %111 = vector.extract_strided_slice %1 {offsets = [0, 16], sizes = [8, 1], strides = [1, 1]} : vector<8x19xf32> to vector<8x1xf32>
    %112 = vector.broadcast %111 : vector<8x1xf32> to vector<8x128xf32>
    %113 = arith.mulf %70, %112 : vector<8x128xf32>
    %114 = vector.extract_strided_slice %1 {offsets = [0, 17], sizes = [8, 1], strides = [1, 1]} : vector<8x19xf32> to vector<8x1xf32>
    %115 = vector.broadcast %114 : vector<8x1xf32> to vector<8x128xf32>
    %116 = arith.mulf %90, %115 : vector<8x128xf32>
    %117 = arith.addf %113, %116 : vector<8x128xf32>
    %118 = vector.extract_strided_slice %1 {offsets = [0, 18], sizes = [8, 1], strides = [1, 1]} : vector<8x19xf32> to vector<8x1xf32>
    %119 = vector.broadcast %118 : vector<8x1xf32> to vector<8x128xf32>
    %120 = arith.mulf %110, %119 : vector<8x128xf32>
    %121 = arith.addf %117, %120 : vector<8x128xf32>
    %122 = vector.broadcast %6 : f32 to vector<8x128xf32>
    %123 = arith.addf %121, %122 : vector<8x128xf32>
    %124 = arith.mulf %123, %123 : vector<8x128xf32>
    %cst_15 = arith.constant dense<0.000000e+00> : vector<128xf32>
    %125 = vector.multi_reduction <add>, %124, %cst_15 [0] : vector<8x128xf32> to vector<128xf32>
    %126 = vector.shape_cast %125 : vector<128xf32> to vector<1x128xf32>
    %127 = math.rsqrt %126 : vector<1x128xf32>
    %128 = vector.broadcast %127 : vector<1x128xf32> to vector<8x128xf32>
    %129 = arith.mulf %123, %128 : vector<8x128xf32>
    %c0_16 = arith.constant 0 : index
    %c0_17 = arith.constant 0 : index
    %130 = vector.load %arg4[%c0_16, %c0_17] : memref<8x128xf32, #tpu.memory_space<vmem>>, vector<8x128xf32>
    tpu.vector_store %arg4[%c0_16, %c0_17], %129 {strides = array<i32>} : memref<8x128xf32, #tpu.memory_space<vmem>>, vector<8x128xf32>,
    return
  }
  func.func @transform_0(%arg0: i32) -> (i32, i32) {
    %c0_i32 = arith.constant 0 : i32
    %c0_i32_0 = arith.constant 0 : i32
    return %c0_i32, %arg0 : i32, i32
  }
  func.func @transform_1(%arg0: i32) -> (i32, i32) {
    %c0_i32 = arith.constant 0 : i32
    %c0_i32_0 = arith.constant 0 : i32
    %c0_i32_1 = arith.constant 0 : i32
    return %c0_i32, %c0_i32_0 : i32, i32
  }
  func.func @transform_2(%arg0: i32) -> i32 {
    %c0_i32 = arith.constant 0 : i32
    %c0_i32_0 = arith.constant 0 : i32
    return %c0_i32 : i32
  }
  func.func @transform_3(%arg0: i32) -> (i32, i32) {
    %c0_i32 = arith.constant 0 : i32
    %c0_i32_0 = arith.constant 0 : i32
    return %c0_i32, %arg0 : i32, i32
  }
}

</mosaic_0001>

<llo_original>
// kernel: tpu_custom_call.1
$region0: #{tpu_custom_call.1}
  #allocation0 [shape = 'u32[]', space=smem, size = 0x4, offset = 0x4, fixed_abs, tag = 'smem constant byte address 0x4 - core index']
  #allocation1 [shape = 'u32[144,128]{1,0:T(1,128)}', space=vmem, size = 0x12000, scoped, tag = 'internal scratch']
  %s0 = inlined_call_operand.hbm [shape: f32[8,128], index: 0, kind: input, shape index: {}]
  %s1 = inlined_call_operand.hbm [shape: f32[8,19], index: 1, kind: input, shape index: {}]
  %s2 = inlined_call_operand.vmem [shape: f32[5], index: 2, kind: input, shape index: {}]
  %s3 = inlined_call_operand.hbm [shape: f32[8,128], index: 3, kind: output, shape index: {}]
  %s4 = sld [smem:[#allocation0]]
  $region34: #{tpu_custom_call.1} parent=0
    _
  %s6 = ssub.s32 1, %s4
  %s7 = scalar_select 0, %s6, %s4
  $region1: #{tpu_custom_call.1} parent=0
    #allocation2 [shape = 'u8[4096]{0}', space=vmem, size = 0x1000, scoped, tag = 'input window, operand 0, single buffered']
    #allocation3 [shape = 's32[1]{0}', space=sflag, size = 0x4, scoped, tag = 'scoped memory for tpu_custom_call.1']
    #allocation4 [shape = 's32[1]{0}', space=sflag, size = 0x4, scoped, tag = 'scoped memory for tpu_custom_call.1']
    #allocation5 [shape = 's32[1]{0}', space=sflag, size = 0x4, scoped, tag = 'scoped memory for tpu_custom_call.1']
    #allocation6 [shape = 'u8[4096]{0}', space=vmem, size = 0x1000, scoped, tag = 'input window, operand 1, single buffered']
    #allocation7 [shape = 's32[1]{0}', space=sflag, size = 0x4, scoped, tag = 'scoped memory for tpu_custom_call.1']
    #allocation8 [shape = 'u8[512]{0}', space=smem, size = 0x200, scoped, tag = 'input window, operand 2, single buffered']
    #allocation9 [shape = 'u8[4096]{0}', space=vmem, size = 0x1000, scoped, tag = 'output window, operand 0, single buffered']
    %8 = vsyncpa [#allocation3], 0
    %9 = vsyncpa [#allocation7], 0
    %10 = vsyncpa [#allocation5], 0
    %11 = vsyncpa [#allocation4], 0
    // Predicated region
    $region2: #{tpu_custom_call.1} parent=1 // pred_check
      _
    $region3: #{tpu_custom_call.1} parent=1 // pred_check_branch
      %13 = sbr.rel (0) target = $region5
    $region4: #{tpu_custom_call.1} parent=1 // pred_region
      %s15 = ssub.s32 128, 128
      %16 = vsyncadd [#allocation3], %s15
      %s18 = sshll.u32 [#allocation2], 4
      %s19 = int_to_ptr.vmem [resolvable:$true] %s18
      %21 = dma.hbm_to_vmem [thread:$0]  %s0, 128, %s19, [#allocation3]
    $region5: #{tpu_custom_call.1} parent=1 // pred_fallthru
      _
    // Predicated region
    $region6: #{tpu_custom_call.1} parent=1 // pred_check
      _
    $region7: #{tpu_custom_call.1} parent=1 // pred_check_branch
      %23 = sbr.rel (0) target = $region9
    $region8: #{tpu_custom_call.1} parent=1 // pred_region
      %s25 = ssub.s32 128, 128
      %26 = vsyncadd [#allocation7], %s25
      %s28 = sshll.u32 [#allocation6], 4
      %s29 = int_to_ptr.vmem [resolvable:$true] %s28
      %31 = dma.hbm_to_vmem [thread:$0]  %s1, 128, %s29, [#allocation7]
    $region9: #{tpu_custom_call.1} parent=1 // pred_fallthru
      _
    // Predicated region
    $region10: #{tpu_custom_call.1} parent=1 // pred_check
      _
    $region11: #{tpu_custom_call.1} parent=1 // pred_check_branch
      %33 = sbr.rel (0) target = $region13
    $region12: #{tpu_custom_call.1} parent=1 // pred_region
      %s35 = ssub.s32 16, 16
      %36 = vsyncadd [#allocation5], %s35
      %s38 = sshll.u32 %s2, 4
      %s39 = int_to_ptr.vmem [resolvable:$true] %s38
      %41 = dma.vmem_to_smem %s39, 16, [#allocation8], [#allocation5]
    $region13: #{tpu_custom_call.1} parent=1 // pred_fallthru
      _
    // Predicated region
    $region14: #{tpu_custom_call.1} parent=1 // pred_check
      _
    $region15: #{tpu_custom_call.1} parent=1 // pred_check_branch
      %43 = sbr.rel (0) target = $region17
    $region16: #{tpu_custom_call.1} parent=1 // pred_region
      %44 = dma.done [#allocation3], 128
    $region17: #{tpu_custom_call.1} parent=1 // pred_fallthru
      _
    // Predicated region
    $region18: #{tpu_custom_call.1} parent=1 // pred_check
      _
    $region19: #{tpu_custom_call.1} parent=1 // pred_check_branch
      %46 = sbr.rel (0) target = $region21
    $region20: #{tpu_custom_call.1} parent=1 // pred_region
      %47 = dma.done [#allocation7], 128
    $region21: #{tpu_custom_call.1} parent=1 // pred_fallthru
      _
    // Predicated region
    $region22: #{tpu_custom_call.1} parent=1 // pred_check
      _
    $region23: #{tpu_custom_call.1} parent=1 // pred_check_branch
      %49 = sbr.rel (0) target = $region25
    $region24: #{tpu_custom_call.1} parent=1 // pred_region
      %50 = dma.done [#allocation5], 16
    $region25: #{tpu_custom_call.1} parent=1 // pred_fallthru
      _
    %51 = sfence
    %v52 = vld [vmem:[#allocation2] sm:$0xff]
    %v53 = vld [vmem:[#allocation6] sm:$0xff]
    %s54 = sld [smem:[#allocation8]]
    %s55 = sld [smem:[#allocation8 + $0x1]]
    %s56 = sld [smem:[#allocation8 + $0x2]]
    %s57 = sld [smem:[#allocation8 + $0x3]]
    %s58 = sld [smem:[#allocation8 + $0x4]]
    %60 = vset.pattern.permute.xlu0 0
    %61 = vperm.xlu0 %60, %v53
    %v62 = vpop.permute.xlu0 %61
    %v64 = vmul.f32 %v52, %v62
    %v65 = vstv %s54
    %v66 = vadd.f32 %v64, %v65
    %67 = vset.pattern.permute.xlu0 1
    %68 = vperm.xlu0 %67, %v53
    %v69 = vpop.permute.xlu0 %68
    %v71 = vmul.f32 %v52, %v69
    %72 = vset.pattern.permute.xlu0 4
    %73 = vperm.xlu0 %72, %v53
    %v74 = vpop.permute.xlu0 %73
    %v76 = vadd.f32 %v71, %v74
    %v77 = vmul.f32 %v76, 0.70710677
    %v78 = verf.f32.pop %v76
    %v79 = vadd.f32 %v78, 1.0
    %v80 = vmul.f32 %v77, %v79
    %v81 = vadd.f32 %v66, %v80
    %82 = vset.pattern.permute.xlu0 2
    %83 = vperm.xlu0 %82, %v53
    %v84 = vpop.permute.xlu0 %83
    %v86 = vmul.f32 %v52, %v84
    %87 = vset.pattern.permute.xlu0 5
    %88 = vperm.xlu0 %87, %v53
    %v89 = vpop.permute.xlu0 %88
    %v91 = vadd.f32 %v86, %v89
    %v92 = vmul.f32 %v91, 0.70710677
    %v93 = verf.f32.pop %v91
    %v94 = vadd.f32 %v93, 1.0
    %v95 = vmul.f32 %v92, %v94
    %v96 = vadd.f32 %v66, %v95
    %97 = vset.pattern.permute.xlu0 3
    %98 = vperm.xlu0 %97, %v53
    %v99 = vpop.permute.xlu0 %98
    %v101 = vmul.f32 %v52, %v99
    %102 = vset.pattern.permute.xlu0 6
    %103 = vperm.xlu0 %102, %v53
    %v104 = vpop.permute.xlu0 %103
    %v106 = vadd.f32 %v101, %v104
    %v107 = vmul.f32 %v106, 0.70710677
    %v108 = verf.f32.pop %v106
    %v109 = vadd.f32 %v108, 1.0
    %v110 = vmul.f32 %v107, %v109
    %v111 = vadd.f32 %v66, %v110
    %112 = vset.pattern.permute.xlu0 7
    %113 = vperm.xlu0 %112, %v53
    %v114 = vpop.permute.xlu0 %113
    %v116 = vmul.f32 %v81, %v114
    %117 = vset.pattern.permute.xlu0 10
    %118 = vperm.xlu0 %117, %v53
    %v119 = vpop.permute.xlu0 %118
    %v121 = vmul.f32 %v96, %v119
    %v122 = vadd.f32 %v116, %v121
    %123 = vset.pattern.permute.xlu0 13
    %124 = vperm.xlu0 %123, %v53
    %v125 = vpop.permute.xlu0 %124
    %v127 = vmul.f32 %v111, %v125
    %v128 = vadd.f32 %v122, %v127
    %v129 = vstv %s55
    %v130 = vadd.f32 %v128, %v129
    %v131 = vmul.f32 %v130, 0.70710677
    %v132 = verf.f32.pop %v130
    %v133 = vadd.f32 %v132, 1.0
    %v134 = vmul.f32 %v131, %v133
    %v135 = vadd.f32 %v96, %v134
    %136 = vset.pattern.permute.xlu0 8
    %137 = vperm.xlu0 %136, %v53
    %v138 = vpop.permute.xlu0 %137
    %v140 = vmul.f32 %v81, %v138
    %141 = vset.pattern.permute.xlu0 11
    %142 = vperm.xlu0 %141, %v53
    %v143 = vpop.permute.xlu0 %142
    %v145 = vmul.f32 %v96, %v143
    %v146 = vadd.f32 %v140, %v145
    %147 = vset.pattern.permute.xlu0 14
    %148 = vperm.xlu0 %147, %v53
    %v149 = vpop.permute.xlu0 %148
    %v151 = vmul.f32 %v111, %v149
    %v152 = vadd.f32 %v146, %v151
    %v153 = vstv %s56
    %v154 = vadd.f32 %v152, %v153
    %v155 = vmul.f32 %v154, 0.70710677
    %v156 = verf.f32.pop %v154
    %v157 = vadd.f32 %v156, 1.0
    %v158 = vmul.f32 %v155, %v157
    %v159 = vadd.f32 %v96, %v158
    %160 = vset.pattern.permute.xlu0 9
    %161 = vperm.xlu0 %160, %v53
    %v162 = vpop.permute.xlu0 %161
    %v164 = vmul.f32 %v81, %v162
    %165 = vset.pattern.permute.xlu0 12
    %166 = vperm.xlu0 %165, %v53
    %v167 = vpop.permute.xlu0 %166
    %v169 = vmul.f32 %v96, %v167
    %v170 = vadd.f32 %v164, %v169
    %171 = vset.pattern.permute.xlu0 15
    %172 = vperm.xlu0 %171, %v53
    %v173 = vpop.permute.xlu0 %172
    %v175 = vmul.f32 %v111, %v173
    %v176 = vadd.f32 %v170, %v175
    %v177 = vstv %s57
    %v178 = vadd.f32 %v176, %v177
    %v179 = vmul.f32 %v178, 0.70710677
    %v180 = verf.f32.pop %v178
    %v181 = vadd.f32 %v180, 1.0
    %v182 = vmul.f32 %v179, %v181
    %v183 = vadd.f32 %v96, %v182
    %184 = vset.pattern.permute.xlu0 16
    %185 = vperm.xlu0 %184, %v53
    %v186 = vpop.permute.xlu0 %185
    %v188 = vmul.f32 %v135, %v186
    %189 = vset.pattern.permute.xlu0 17
    %190 = vperm.xlu0 %189, %v53
    %v191 = vpop.permute.xlu0 %190
    %v193 = vmul.f32 %v159, %v191
    %v194 = vadd.f32 %v188, %v193
    %195 = vset.pattern.permute.xlu0 18
    %196 = vperm.xlu0 %195, %v53
    %v197 = vpop.permute.xlu0 %196
    %v199 = vmul.f32 %v183, %v197
    %v200 = vadd.f32 %v194, %v199
    %v201 = vstv %s58
    %v202 = vadd.f32 %v200, %v201
    %v203 = vmul.f32 %v202, %v202
    %v204 = vrot.slane %v203, 4
    %v205 = vadd.f32 %v203, %v204
    %v206 = vrot.slane %v205, 2
    %v207 = vadd.f32 %v205, %v206
    %v208 = vrot.slane %v207, 1
    %v209 = vadd.f32 %v207, %v208
    %v210 = vrsqrt.pop %v209
    %v211 = vmul.f32 %v202, %v210
    %212 = vst [vmem:[#allocation9] sm:$0xff] %v211
    // Predicated region
    $region26: #{tpu_custom_call.1} parent=1 // pred_check
      _
    $region27: #{tpu_custom_call.1} parent=1 // pred_check_branch
      %214 = sbr.rel (0) target = $region29
    $region28: #{tpu_custom_call.1} parent=1 // pred_region
      %s216 = ssub.s32 128, 128
      %217 = vsyncadd [#allocation4], %s216
      %s219 = sshll.u32 [#allocation9], 4
      %s220 = int_to_ptr.vmem [resolvable:$true] %s219
      %222 = dma.vmem_to_hbm [thread:$0]  %s220, 128, %s3, [#allocation4]
    $region29: #{tpu_custom_call.1} parent=1 // pred_fallthru
      _
    // Predicated region
    $region30: #{tpu_custom_call.1} parent=1 // pred_check
      _
    $region31: #{tpu_custom_call.1} parent=1 // pred_check_branch
      %224 = sbr.rel (0) target = $region33
    $region32: #{tpu_custom_call.1} parent=1 // pred_region
      %225 = dma.done [#allocation4], 128
    $region33: #{tpu_custom_call.1} parent=1 // pred_fallthru
      _
    %226 = vsyncpa [#allocation3], 1
    %227 = vsyncpa [#allocation7], 1
    %228 = vsyncpa [#allocation4], 1
    %229 = vsyncpa [#allocation5], 1

</llo_original>
